<compile_context>
chip_gen: v7x
topology: tpu7x:2x2x1
jax: 0.10.0
libtpu: 0.0.40
codegen_flags: <defaults>
</compile_context>

<pallas_src>
import functools

import jax
import jax.numpy as jnp
from jax.experimental import pallas as pl
from jax.experimental.pallas import tpu as pltpu

LANE = 128
SUBLANE = 8


def _round_up(x, m):
    return (x + m - 1) // m * m


def _pad2(a, rows, cols):
    out = jnp.zeros((rows, cols), a.dtype)
    return out.at[: a.shape[0], : a.shape[1]].set(a)


# ---------------------------------------------------------------------------
# Fused Pallas kernel: one-hot build + merged first-layer matmul + full MLP.
# ---------------------------------------------------------------------------
def _make_fused_kernel(vp, n_cat):
    """vp: padded one-hot width (static); n_cat: #categorical columns."""

    def kernel(*refs):
        xcat_ref, xnum_ref, w1_ref, b1_ref = refs[:4]
        layer_refs = refs[4:-1]
        o_ref = refs[-1]
        tb = xcat_ref.shape[0]

        # One-hot over the combined (offset) vocabulary.  Offsets are already
        # added host-side, so per-column hot lanes are disjoint: OR the C
        # integer compares, then a single cast to f32.
        idx = xcat_ref[...]                                    # [TB, C] int32
        iota = jax.lax.broadcasted_iota(jnp.int32, (tb, vp), 1)
        hot = iota == idx[:, 0:1]
        for i in range(1, n_cat):
            hot = jnp.logical_or(hot, iota == idx[:, i:i + 1])
        onehot = hot.astype(jnp.float32)                       # [TB, vp]

        # Merged first layer:  [onehot | x_num] @ [We ; Wn]  (single MXU op).
        # onehot is a multiple of 128 lanes wide, so the 8-lane numerical tail
        # starts at a lane-aligned offset in the concat.
        lhs = jnp.concatenate([onehot, xnum_ref[...]], axis=1)  # [TB, vp+8]
        h = jnp.dot(lhs, w1_ref[...], preferred_element_type=jnp.float32)
        h = jnp.maximum(h + b1_ref[...], 0.0)

        # Remaining layers (ReLU on all but the final Linear); per-layer BN is
        # folded into the next layer's W/b, dropout is identity in eval.
        n_layers = len(layer_refs) // 2
        for j in range(n_layers):
            w_ref = layer_refs[2 * j]
            b_ref = layer_refs[2 * j + 1]
            h = jnp.dot(h, w_ref[...], preferred_element_type=jnp.float32)
            h = h + b_ref[...]
            if j < n_layers - 1:
                h = jnp.maximum(h, 0.0)
        o_ref[...] = h

    return kernel


# ---------------------------------------------------------------------------
# Parameter construction (deterministic, mirrors nn.Module __init__ shapes)
# ---------------------------------------------------------------------------
def init_params(key, embedding_size, num_numerical_cols, output_size, layers):
    params = {}
    keys = jax.random.split(key, 64)
    kidx = 0

    def nxt():
        nonlocal kidx
        k = keys[kidx]
        kidx += 1
        return k

    # embeddings: nn.Embedding(ni, nf) -> table [ni, nf]
    params["emb"] = [
        jax.random.normal(nxt(), (ni, nf), jnp.float32) for ni, nf in embedding_size
    ]

    # BatchNorm1d(num_numerical_cols), eval mode -> scale/shift
    eps = 1e-5
    gamma = 1.0 + 0.1 * jax.random.normal(nxt(), (num_numerical_cols,), jnp.float32)
    beta = 0.1 * jax.random.normal(nxt(), (num_numerical_cols,), jnp.float32)
    r_mean = 0.05 * jax.random.normal(nxt(), (num_numerical_cols,), jnp.float32)
    r_var = jnp.abs(1.0 + 0.1 * jax.random.normal(nxt(), (num_numerical_cols,),
                                                  jnp.float32))
    s = gamma / jnp.sqrt(r_var + eps)
    params["bn_num_scale"] = s.reshape(1, -1)
    params["bn_num_shift"] = (beta - r_mean * s).reshape(1, -1)

    num_categorical_cols = sum(nf for _, nf in embedding_size)
    input_size = num_categorical_cols + num_numerical_cols

    # hidden blocks: Linear(input_size, i) + ReLU + BatchNorm1d(i) + Dropout
    params["hidden"] = []
    for i in layers:
        bound = 1.0 / jnp.sqrt(jnp.float32(input_size))
        w = jax.random.uniform(nxt(), (input_size, i), jnp.float32, -bound, bound)
        b = jax.random.uniform(nxt(), (1, i), jnp.float32, -bound, bound)
        g = 1.0 + 0.1 * jax.random.normal(nxt(), (i,), jnp.float32)
        bt = 0.1 * jax.random.normal(nxt(), (i,), jnp.float32)
        rm = 0.05 * jax.random.normal(nxt(), (i,), jnp.float32)
        rv = jnp.abs(1.0 + 0.1 * jax.random.normal(nxt(), (i,), jnp.float32))
        sc = g / jnp.sqrt(rv + eps)
        sh = bt - rm * sc
        params["hidden"].append((w, b, sc.reshape(1, -1), sh.reshape(1, -1)))
        input_size = i

    # final Linear(layers[-1], output_size)
    bound = 1.0 / jnp.sqrt(jnp.float32(layers[-1]))
    w = jax.random.uniform(nxt(), (layers[-1], output_size), jnp.float32,
                           -bound, bound)
    b = jax.random.uniform(nxt(), (1, output_size), jnp.float32, -bound, bound)
    params["out"] = (w, b)
    return params


# ---------------------------------------------------------------------------
# Fold embeddings + eval-mode BN into the Linears; build the stacked W1; pad.
# ---------------------------------------------------------------------------
def fuse_params(params, embedding_size, num_numerical_cols, output_size, layers):
    dc = sum(nf for _, nf in embedding_size)
    dn = num_numerical_cols
    dnp = _round_up(dn, SUBLANE)                   # numerical lanes, padded to 8
    vocab = sum(ni for ni, _ in embedding_size)
    vp = _round_up(vocab, LANE)                    # one-hot width, padded to 128

    offsets, acc = [], 0
    for ni, _ in embedding_size:
        offsets.append(acc)
        acc += ni
    offsets = jnp.asarray(offsets, jnp.int32)      # added host-side to indices

    # first hidden block: fold numerical BN + embedding tables into W1 / b1
    w1, b1, s1, t1 = params["hidden"][0]           # [dc+dn,H1],[1,H1],[1,H1],[1,H1]
    w1c, w1n = w1[:dc], w1[dc:]
    s0 = params["bn_num_scale"][0]                 # [dn]
    t0 = params["bn_num_shift"][0]                 # [dn]
    wn = w1n * s0[:, None]                         # [dn, H1]
    b1f = b1 + t0 @ w1n                            # [1, H1]
    we_blocks, c_off = [], 0
    for tbl, (_, nf) in zip(params["emb"], embedding_size):
        we_blocks.append(tbl @ w1c[c_off:c_off + nf])
        c_off += nf
    we = jnp.concatenate(we_blocks, axis=0)        # [vocab, H1]

    # fold BN of layer k into Linear k+1 (exact in eval mode)
    prev_s, prev_t = s1[0], t1[0]
    mats = []
    for (w, b, s, t) in params["hidden"][1:]:
        mats.append((prev_s[:, None] * w, b + prev_t @ w))
        prev_s, prev_t = s[0], t[0]
    w_out, b_out = params["out"]
    mats.append((prev_s[:, None] * w_out, b_out + prev_t @ w_out))

    # Pad hidden widths to 128 lanes (zero padding is exact: padded columns
    # produce relu(0)=0 activations hitting zero weight rows).  The OUTPUT
    # width is padded only to 8 to avoid 64x write amplification in HBM.
    widths = list(layers) + [output_size]
    pw = [_round_up(w, LANE) for w in widths[:-1]] + [_round_up(output_size, SUBLANE)]
    h1p = pw[0]

    # stacked first-layer weight: one-hot rows (vp) then numerical rows (dnp)
    w1_stacked = jnp.concatenate(
        [_pad2(we, vp, h1p), _pad2(wn, dnp, h1p)], axis=0)     # [vp+dnp, h1p]

    return {
        "offsets": offsets,
        "vp": vp,
        "dnp": dnp,
        "w1": w1_stacked,
        "b1": _pad2(b1f, 1, h1p),
        "mats": [(_pad2(w, pw[k], pw[k + 1]), _pad2(b, 1, pw[k + 1]))
                 for k, (w, b) in enumerate(mats)],
        "out_width": output_size,
    }


# ---------------------------------------------------------------------------
# Forward pass: single fused pallas_call, batch-tiled grid (>=2 tiles when
# possible so megacore sharding engages on v7x).
# ---------------------------------------------------------------------------
def model_forward(fused, x_categorical, x_numerical, *, block_b=2048):
    b = x_categorical.shape[0]
    # batch tile: multiple of 8, capped by block_b, and at least 2 grid steps
    # whenever b >= 16 (so both v7x TensorCores run under "parallel").
    tb = min(block_b, max(SUBLANE, _round_up((b + 1) // 2, SUBLANE)))
    bp = _round_up(b, tb)

    # add static vocabulary offsets host-side; pad batch + numerical lanes
    xcat = x_categorical.astype(jnp.int32) + fused["offsets"][None, :]
    if bp != b:
        xcat = jnp.pad(xcat, ((0, bp - b), (0, 0)))
    xnum = _pad2(x_numerical.astype(jnp.float32), bp, fused["dnp"])

    c = xcat.shape[1]
    dnp = fused["dnp"]
    vpn, h1p = fused["w1"].shape                   # vp + dnp, padded H1
    outp = fused["mats"][-1][0].shape[1]

    args = [xcat, xnum, fused["w1"], fused["b1"]]
    in_specs = [
        pl.BlockSpec((tb, c), lambda i: (i, 0)),       # offset categorical idx
        pl.BlockSpec((tb, dnp), lambda i: (i, 0)),     # numerical features
        pl.BlockSpec((vpn, h1p), lambda i: (0, 0)),    # stacked/folded W1
        pl.BlockSpec((1, h1p), lambda i: (0, 0)),      # folded b1
    ]
    for (w, bias) in fused["mats"]:
        args.extend([w, bias])
        in_specs.append(pl.BlockSpec(w.shape, lambda i: (0, 0)))
        in_specs.append(pl.BlockSpec(bias.shape, lambda i: (0, 0)))

    out = pl.pallas_call(
        _make_fused_kernel(fused["vp"], c),
        out_shape=jax.ShapeDtypeStruct((bp, outp), jnp.float32),
        grid=(bp // tb,),
        in_specs=in_specs,
        out_specs=pl.BlockSpec((tb, outp), lambda i: (i, 0)),
        compiler_params=pltpu.CompilerParams(
            dimension_semantics=("parallel",)),        # megacore on v7x
    )(*args)
    return out[:b, :fused["out_width"]]


# ---------------------------------------------------------------------------
# Pure-JAX reference (eval-mode semantics of the PyTorch module)
# ---------------------------------------------------------------------------
def reference_forward(params, x_categorical, x_numerical):
    embs = [tbl[x_categorical[:, i]] for i, tbl in enumerate(params["emb"])]
    x = jnp.concatenate(embs, axis=1)
    xn = x_numerical * params["bn_num_scale"] + params["bn_num_shift"]
    x = jnp.concatenate([x, xn], axis=1)
    for (w, b, s, t) in params["hidden"]:
        x = jnp.maximum(x @ w + b, 0.0) * s + t
    w, b = params["out"]
    return x @ w + b


if __name__ == "__main__":
    # small config consistent with the module's constructor
    embedding_size = [(4, 2), (3, 2), (2, 1), (6, 3)]   # 4 categorical columns
    num_numerical_cols = 6
    output_size = 2
    layers = [32, 16]
    batch = 8

    key = jax.random.PRNGKey(0)
    kp, kc, kn = jax.random.split(key, 3)

    params = init_params(kp, embedding_size, num_numerical_cols, output_size,
                         layers)
    fused = fuse_params(params, embedding_size, num_numerical_cols,
                        output_size, layers)

    kcols = jax.random.split(kc, len(embedding_size))
    cols = [jax.random.randint(kk, (batch, 1), 0, ni, jnp.int32)
            for (ni, _), kk in zip(embedding_size, kcols)]
    x_categorical = jnp.concatenate(cols, axis=1)            # [8, 4] int32
    x_numerical = jax.random.normal(kn, (batch, num_numerical_cols),
                                    jnp.float32)             # [8, 6] f32

    # TODO(synk): training-mode dropout / batch-statistics BN not implemented;
    # kernel implements eval/inference semantics (dropout=id, BN folded).
    fwd = jax.jit(functools.partial(model_forward, fused))
    out = fwd(x_categorical, x_numerical)
    jax.block_until_ready(out)
    assert out.shape == (batch, output_size)

    ref = reference_forward(params, x_categorical, x_numerical)
    assert jnp.allclose(out, ref, rtol=1e-4, atol=1e-4), (
        float(jnp.max(jnp.abs(out - ref))))
    print("KERNEL_OK")
</pallas_src>

<mosaic_0001>
module attributes {stable_mosaic.version = 11 : i64} {
  func.func @kernel(%arg0: i32, %arg1: memref<8x4xi32, #tpu.memory_space<vmem>>, %arg2: memref<8x8xf32, #tpu.memory_space<vmem>>, %arg3: memref<136x128xf32, #tpu.memory_space<vmem>>, %arg4: memref<1x128xf32, #tpu.memory_space<vmem>>, %arg5: memref<128x128xf32, #tpu.memory_space<vmem>>, %arg6: memref<1x128xf32, #tpu.memory_space<vmem>>, %arg7: memref<128x8xf32, #tpu.memory_space<vmem>>, %arg8: memref<1x8xf32, #tpu.memory_space<vmem>>, %arg9: memref<8x8xf32, #tpu.memory_space<vmem>>) attributes {dimension_semantics = [#tpu.dimension_semantics<parallel>], iteration_bounds = array<i64: 1>, scalar_prefetch = 0 : i64, scratch_operands = 0 : i64, tpu.core_type = #tpu.core_type<tc>, window_params = [{transform_indices = @transform_0, window_bounds = array<i64: 8, 4>}, {transform_indices = @transform_1, window_bounds = array<i64: 8, 8>}, {pipeline_mode = #tpu.pipeline_mode<synchronous>, transform_indices = @transform_2, window_bounds = array<i64: 136, 128>}, {pipeline_mode = #tpu.pipeline_mode<synchronous>, transform_indices = @transform_3, window_bounds = array<i64: 1, 128>}, {pipeline_mode = #tpu.pipeline_mode<synchronous>, transform_indices = @transform_4, window_bounds = array<i64: 128, 128>}, {pipeline_mode = #tpu.pipeline_mode<synchronous>, transform_indices = @transform_5, window_bounds = array<i64: 1, 128>}, {pipeline_mode = #tpu.pipeline_mode<synchronous>, transform_indices = @transform_6, window_bounds = array<i64: 128, 8>}, {pipeline_mode = #tpu.pipeline_mode<synchronous>, transform_indices = @transform_7, window_bounds = array<i64: 1, 8>}, {transform_indices = @transform_8, window_bounds = array<i64: 8, 8>}]} {
    %c0 = arith.constant 0 : index
    %c0_0 = arith.constant 0 : index
    %0 = vector.load %arg1[%c0, %c0_0] : memref<8x4xi32, #tpu.memory_space<vmem>>, vector<8x4xi32>
    %1 = tpu.iota {dimensions = array<i32: 1>} : vector<8x128xi32>
    %2 = vector.extract_strided_slice %0 {offsets = [0, 0], sizes = [8, 1], strides = [1, 1]} : vector<8x4xi32> to vector<8x1xi32>
    %3 = vector.broadcast %2 : vector<8x1xi32> to vector<8x128xi32>
    %4 = arith.cmpi eq, %1, %3 : vector<8x128xi32>
    %5 = vector.extract_strided_slice %0 {offsets = [0, 1], sizes = [8, 1], strides = [1, 1]} : vector<8x4xi32> to vector<8x1xi32>
    %6 = vector.broadcast %5 : vector<8x1xi32> to vector<8x128xi32>
    %7 = arith.cmpi eq, %1, %6 : vector<8x128xi32>
    %8 = arith.ori %4, %7 : vector<8x128xi1>
    %9 = vector.extract_strided_slice %0 {offsets = [0, 2], sizes = [8, 1], strides = [1, 1]} : vector<8x4xi32> to vector<8x1xi32>
    %10 = vector.broadcast %9 : vector<8x1xi32> to vector<8x128xi32>
    %11 = arith.cmpi eq, %1, %10 : vector<8x128xi32>
    %12 = arith.ori %8, %11 : vector<8x128xi1>
    %13 = vector.extract_strided_slice %0 {offsets = [0, 3], sizes = [8, 1], strides = [1, 1]} : vector<8x4xi32> to vector<8x1xi32>
    %14 = vector.broadcast %13 : vector<8x1xi32> to vector<8x128xi32>
    %15 = arith.cmpi eq, %1, %14 : vector<8x128xi32>
    %16 = arith.ori %12, %15 : vector<8x128xi1>
    %17 = arith.extui %16 : vector<8x128xi1> to vector<8x128xi32>
    %18 = arith.sitofp %17 : vector<8x128xi32> to vector<8x128xf32>
    %c0_1 = arith.constant 0 : index
    %c0_2 = arith.constant 0 : index
    %19 = vector.load %arg2[%c0_1, %c0_2] : memref<8x8xf32, #tpu.memory_space<vmem>>, vector<8x8xf32>
    %20 = tpu.concatenate %18, %19 in 1 : vector<8x128xf32>, vector<8x8xf32> -> vector<8x136xf32>
    %c0_3 = arith.constant 0 : index
    %c0_4 = arith.constant 0 : index
    %21 = vector.load %arg3[%c0_3, %c0_4] : memref<136x128xf32, #tpu.memory_space<vmem>>, vector<136x128xf32>
    %cst = arith.constant dense<0.000000e+00> : vector<8x128xf32>
    %22 = tpu.matmul %20, %21, %cst {dimension_numbers = #tpu.dot_dimension_numbers<[1], [0], [0], [1], [0, 0, 1, 1], [], []>} : vector<8x136xf32>, vector<136x128xf32>, vector<8x128xf32> -> vector<8x128xf32>
    %c0_5 = arith.constant 0 : index
    %c0_6 = arith.constant 0 : index
    %23 = vector.load %arg4[%c0_5, %c0_6] : memref<1x128xf32, #tpu.memory_space<vmem>>, vector<1x128xf32>
    %24 = vector.broadcast %23 : vector<1x128xf32> to vector<8x128xf32>
    %25 = arith.addf %22, %24 : vector<8x128xf32>
    %cst_7 = arith.constant 0.000000e+00 : f32
    %26 = vector.broadcast %cst_7 : f32 to vector<8x128xf32>
    %27 = arith.maximumf %25, %26 : vector<8x128xf32>
    %c0_8 = arith.constant 0 : index
    %c0_9 = arith.constant 0 : index
    %28 = vector.load %arg5[%c0_8, %c0_9] : memref<128x128xf32, #tpu.memory_space<vmem>>, vector<128x128xf32>
    %cst_10 = arith.constant dense<0.000000e+00> : vector<8x128xf32>
    %29 = tpu.matmul %27, %28, %cst_10 {dimension_numbers = #tpu.dot_dimension_numbers<[1], [0], [0], [1], [0, 0, 1, 1], [], []>} : vector<8x128xf32>, vector<128x128xf32>, vector<8x128xf32> -> vector<8x128xf32>
    %c0_11 = arith.constant 0 : index
    %c0_12 = arith.constant 0 : index
    %30 = vector.load %arg6[%c0_11, %c0_12] : memref<1x128xf32, #tpu.memory_space<vmem>>, vector<1x128xf32>
    %31 = vector.broadcast %30 : vector<1x128xf32> to vector<8x128xf32>
    %32 = arith.addf %29, %31 : vector<8x128xf32>
    %cst_13 = arith.constant 0.000000e+00 : f32
    %33 = vector.broadcast %cst_13 : f32 to vector<8x128xf32>
    %34 = arith.maximumf %32, %33 : vector<8x128xf32>
    %c0_14 = arith.constant 0 : index
    %c0_15 = arith.constant 0 : index
    %35 = vector.load %arg7[%c0_14, %c0_15] : memref<128x8xf32, #tpu.memory_space<vmem>>, vector<128x8xf32>
    %cst_16 = arith.constant dense<0.000000e+00> : vector<8x8xf32>
    %36 = tpu.matmul %34, %35, %cst_16 {dimension_numbers = #tpu.dot_dimension_numbers<[1], [0], [0], [1], [0, 0, 1, 1], [], []>} : vector<8x128xf32>, vector<128x8xf32>, vector<8x8xf32> -> vector<8x8xf32>
    %c0_17 = arith.constant 0 : index
    %c0_18 = arith.constant 0 : index
    %37 = vector.load %arg8[%c0_17, %c0_18] : memref<1x8xf32, #tpu.memory_space<vmem>>, vector<1x8xf32>
    %38 = vector.broadcast %37 : vector<1x8xf32> to vector<8x8xf32>
    %39 = arith.addf %36, %38 : vector<8x8xf32>
    %c0_19 = arith.constant 0 : index
    %c0_20 = arith.constant 0 : index
    %40 = vector.load %arg9[%c0_19, %c0_20] : memref<8x8xf32, #tpu.memory_space<vmem>>, vector<8x8xf32>
    tpu.vector_store %arg9[%c0_19, %c0_20], %39 {strides = array<i32>} : memref<8x8xf32, #tpu.memory_space<vmem>>, vector<8x8xf32>,
    return
  }
  func.func @transform_0(%arg0: i32) -> (i32, i32) {
    %c0_i32 = arith.constant 0 : i32
    %c0_i32_0 = arith.constant 0 : i32
    return %arg0, %c0_i32 : i32, i32
  }
  func.func @transform_1(%arg0: i32) -> (i32, i32) {
    %c0_i32 = arith.constant 0 : i32
    %c0_i32_0 = arith.constant 0 : i32
    return %arg0, %c0_i32 : i32, i32
  }
  func.func @transform_2(%arg0: i32) -> (i32, i32) {
    %c0_i32 = arith.constant 0 : i32
    %c0_i32_0 = arith.constant 0 : i32
    %c0_i32_1 = arith.constant 0 : i32
    return %c0_i32, %c0_i32_0 : i32, i32
  }
  func.func @transform_3(%arg0: i32) -> (i32, i32) {
    %c0_i32 = arith.constant 0 : i32
    %c0_i32_0 = arith.constant 0 : i32
    %c0_i32_1 = arith.constant 0 : i32
    return %c0_i32, %c0_i32_0 : i32, i32
  }
  func.func @transform_4(%arg0: i32) -> (i32, i32) {
    %c0_i32 = arith.constant 0 : i32
    %c0_i32_0 = arith.constant 0 : i32
    %c0_i32_1 = arith.constant 0 : i32
    return %c0_i32, %c0_i32_0 : i32, i32
  }
  func.func @transform_5(%arg0: i32) -> (i32, i32) {
    %c0_i32 = arith.constant 0 : i32
    %c0_i32_0 = arith.constant 0 : i32
    %c0_i32_1 = arith.constant 0 : i32
    return %c0_i32, %c0_i32_0 : i32, i32
  }
  func.func @transform_6(%arg0: i32) -> (i32, i32) {
    %c0_i32 = arith.constant 0 : i32
    %c0_i32_0 = arith.constant 0 : i32
    %c0_i32_1 = arith.constant 0 : i32
    return %c0_i32, %c0_i32_0 : i32, i32
  }
  func.func @transform_7(%arg0: i32) -> (i32, i32) {
    %c0_i32 = arith.constant 0 : i32
    %c0_i32_0 = arith.constant 0 : i32
    %c0_i32_1 = arith.constant 0 : i32
    return %c0_i32, %c0_i32_0 : i32, i32
  }
  func.func @transform_8(%arg0: i32) -> (i32, i32) {
    %c0_i32 = arith.constant 0 : i32
    %c0_i32_0 = arith.constant 0 : i32
    return %arg0, %c0_i32 : i32, i32
  }
}

</mosaic_0001>

<llo_original>
// kernel: model_forward.1
$region0: #{model_forward.1}
  #allocation0 [shape = 'u32[]', space=smem, size = 0x4, offset = 0x4, fixed_abs, tag = 'smem constant byte address 0x4 - core index']
  #allocation1 [shape = 'u32[144,128]{1,0:T(1,128)}', space=vmem, size = 0x12000, scoped, tag = 'internal scratch']
  %s0 = inlined_call_operand.vmem [shape: s32[8,4], index: 0, kind: input, shape index: {}]
  %s1 = inlined_call_operand.vmem [shape: f32[8,8], index: 1, kind: input, shape index: {}]
  %s2 = inlined_call_operand.hbm [shape: f32[136,128], index: 2, kind: input, shape index: {}]
  %s3 = inlined_call_operand.vmem [shape: f32[1,128], index: 3, kind: input, shape index: {}]
  %s4 = inlined_call_operand.hbm [shape: f32[128,128], index: 4, kind: input, shape index: {}]
  %s5 = inlined_call_operand.vmem [shape: f32[1,128], index: 5, kind: input, shape index: {}]
  %s6 = inlined_call_operand.hbm [shape: f32[128,8], index: 6, kind: input, shape index: {}]
  %s7 = inlined_call_operand.vmem [shape: f32[1,8], index: 7, kind: input, shape index: {}]
  %s8 = inlined_call_operand.vmem [shape: f32[8,8], index: 8, kind: output, shape index: {}]
  %s9 = sld [smem:[#allocation0]]
  $region54: #{model_forward.1} parent=0
    _
  %s11 = ssub.s32 1, %s9
  %s12 = scalar_select 0, %s11, %s9
  $region1: #{model_forward.1} parent=0
    #allocation2 [shape = 'u8[69632]{0}', space=vmem, size = 0x11000, scoped, tag = 'input window, operand 2, single buffered']
    #allocation3 [shape = 's32[1]{0}', space=sflag, size = 0x4, scoped, tag = 'scoped memory for model_forward.1']
    #allocation4 [shape = 'u8[65536]{0}', space=vmem, size = 0x10000, scoped, tag = 'input window, operand 4, single buffered']
    #allocation5 [shape = 's32[1]{0}', space=sflag, size = 0x4, scoped, tag = 'scoped memory for model_forward.1']
    #allocation6 [shape = 'u8[65536]{0}', space=vmem, size = 0x10000, scoped, tag = 'input window, operand 6, single buffered']
    %13 = vsyncpa [#allocation3], 0
    %14 = vsyncpa [#allocation5], 0
    // Predicated region
    $region2: #{model_forward.1} parent=1 // pred_check
      _
    $region3: #{model_forward.1} parent=1 // pred_check_branch
      %16 = sbr.rel (0) target = $region5
    $region4: #{model_forward.1} parent=1 // pred_region
      _
    $region5: #{model_forward.1} parent=1 // pred_fallthru
      _
    // Predicated region
    $region6: #{model_forward.1} parent=1 // pred_check
      _
    $region7: #{model_forward.1} parent=1 // pred_check_branch
      %18 = sbr.rel (0) target = $region9
    $region8: #{model_forward.1} parent=1 // pred_region
      _
    $region9: #{model_forward.1} parent=1 // pred_fallthru
      _
    // Predicated region
    $region10: #{model_forward.1} parent=1 // pred_check
      _
    $region11: #{model_forward.1} parent=1 // pred_check_branch
      %20 = sbr.rel (0) target = $region13
    $region12: #{model_forward.1} parent=1 // pred_region
      %s22 = ssub.s32 2176, 2176
      %23 = vsyncadd [#allocation3], %s22
      %s24 = sshll.u32 [#allocation2], 4
      %s25 = int_to_ptr.vmem [resolvable:$true] %s24
      %30 = dma.hbm_to_vmem [thread:$0]  %s2, 2176, %s25, [#allocation3], 128, 128, 8
    $region13: #{model_forward.1} parent=1 // pred_fallthru
      _
    // Predicated region
    $region14: #{model_forward.1} parent=1 // pred_check
      _
    $region15: #{model_forward.1} parent=1 // pred_check_branch
      %32 = sbr.rel (0) target = $region17
    $region16: #{model_forward.1} parent=1 // pred_region
      _
    $region17: #{model_forward.1} parent=1 // pred_fallthru
      _
    // Predicated region
    $region18: #{model_forward.1} parent=1 // pred_check
      _
    $region19: #{model_forward.1} parent=1 // pred_check_branch
      %34 = sbr.rel (0) target = $region21
    $region20: #{model_forward.1} parent=1 // pred_region
      %s36 = ssub.s32 2048, 2048
      %37 = vsyncadd [#allocation5], %s36
      %s38 = sshll.u32 [#allocation4], 4
      %s39 = int_to_ptr.vmem [resolvable:$true] %s38
      %44 = dma.hbm_to_vmem [thread:$0]  %s4, 2048, %s39, [#allocation5], 128, 128, 8
    $region21: #{model_forward.1} parent=1 // pred_fallthru
      _
    // Predicated region
    $region22: #{model_forward.1} parent=1 // pred_check
      _
    $region23: #{model_forward.1} parent=1 // pred_check_branch
      %46 = sbr.rel (0) target = $region25
    $region24: #{model_forward.1} parent=1 // pred_region
      _
    $region25: #{model_forward.1} parent=1 // pred_fallthru
      _
    // Predicated region
    $region26: #{model_forward.1} parent=1 // pred_check
      _
    $region27: #{model_forward.1} parent=1 // pred_check_branch
      %48 = sbr.rel (0) target = $region29
    $region28: #{model_forward.1} parent=1 // pred_region
      %s50 = ssub.s32 2048, 2048
      %51 = vsyncadd [#allocation5], %s50
      %s52 = sshll.u32 [#allocation6], 4
      %s53 = int_to_ptr.vmem [resolvable:$true] %s52
      %58 = dma.hbm_to_vmem [thread:$0]  %s6, 2048, %s53, [#allocation5], 128, 128, 8
    $region29: #{model_forward.1} parent=1 // pred_fallthru
      _
    // Predicated region
    $region30: #{model_forward.1} parent=1 // pred_check
      _
    $region31: #{model_forward.1} parent=1 // pred_check_branch
      %60 = sbr.rel (0) target = $region33
    $region32: #{model_forward.1} parent=1 // pred_region
      _
    $region33: #{model_forward.1} parent=1 // pred_fallthru
      _
    // Predicated region
    $region34: #{model_forward.1} parent=1 // pred_check
      _
    $region35: #{model_forward.1} parent=1 // pred_check_branch
      %62 = sbr.rel (0) target = $region37
    $region36: #{model_forward.1} parent=1 // pred_region
      %63 = dma.done [#allocation3], 2176
    $region37: #{model_forward.1} parent=1 // pred_fallthru
      _
    // Predicated region
    $region38: #{model_forward.1} parent=1 // pred_check
      _
    $region39: #{model_forward.1} parent=1 // pred_check_branch
      %65 = sbr.rel (0) target = $region41
    $region40: #{model_forward.1} parent=1 // pred_region
      %66 = dma.done [#allocation5], 2048
    $region41: #{model_forward.1} parent=1 // pred_fallthru
      _
    // Predicated region
    $region42: #{model_forward.1} parent=1 // pred_check
      _
    $region43: #{model_forward.1} parent=1 // pred_check_branch
      %68 = sbr.rel (0) target = $region45
    $region44: #{model_forward.1} parent=1 // pred_region
      %69 = dma.done [#allocation5], 2048
    $region45: #{model_forward.1} parent=1 // pred_fallthru
      _
    %v70 = vld [vmem:[%s0] sm:$0xff]
    %v71 = vlaneseq
    %v72 = vand.u32 %v71, 127
    %73 = vset.pattern.permute.xlu0 0
    %74 = vperm.xlu0 %73, %v70
    %v75 = vpop.permute.xlu0 %74
    %vm76 = vcmp.eq.s32.totalorder %v72, %v75
    %77 = vset.pattern.permute.xlu0 1
    %78 = vperm.xlu0 %77, %v70
    %v79 = vpop.permute.xlu0 %78
    %vm80 = vcmp.eq.s32.totalorder %v72, %v79
    %vm81 = vmor %vm76, %vm80
    %82 = vset.pattern.permute.xlu0 2
    %83 = vperm.xlu0 %82, %v70
    %v84 = vpop.permute.xlu0 %83
    %vm85 = vcmp.eq.s32.totalorder %v72, %v84
    %vm86 = vmor %vm81, %vm85
    %87 = vset.pattern.permute.xlu0 3
    %88 = vperm.xlu0 %87, %v70
    %v89 = vpop.permute.xlu0 %88
    %vm90 = vcmp.eq.s32.totalorder %v72, %v89
    %vm91 = vmor %vm86, %vm90
    %v92 = vsel %vm91, 1, 0
    %v93 = vcvt.s32.f32 %v92
    %v94 = vld [vmem:[%s1] sm:$0xff]
    %v95 = vld [vmem:[#allocation2] sm:$0xff]
    %v96 = vld [vmem:[#allocation2 + $0x8] sm:$0xff]
    %v97 = vld [vmem:[#allocation2 + $0x10] sm:$0xff]
    %v98 = vld [vmem:[#allocation2 + $0x18] sm:$0xff]
    %v99 = vld [vmem:[#allocation2 + $0x20] sm:$0xff]
    %v100 = vld [vmem:[#allocation2 + $0x28] sm:$0xff]
    %v101 = vld [vmem:[#allocation2 + $0x30] sm:$0xff]
    %v102 = vld [vmem:[#allocation2 + $0x38] sm:$0xff]
    %v103 = vld [vmem:[#allocation2 + $0x40] sm:$0xff]
    %v104 = vld [vmem:[#allocation2 + $0x48] sm:$0xff]
    %v105 = vld [vmem:[#allocation2 + $0x50] sm:$0xff]
    %v106 = vld [vmem:[#allocation2 + $0x58] sm:$0xff]
    %v107 = vld [vmem:[#allocation2 + $0x60] sm:$0xff]
    %v108 = vld [vmem:[#allocation2 + $0x68] sm:$0xff]
    %v109 = vld [vmem:[#allocation2 + $0x70] sm:$0xff]
    %v110 = vld [vmem:[#allocation2 + $0x78] sm:$0xff]
    %v111 = vld [vmem:[#allocation2 + $0x80] sm:$0xff]
    %v112 = vld [vmem:[%s3] sm:$0x1]
    %v114 = vlaneseq
    %v115 = vshrl.u32 %v114, 7
    %v116 = vsub.s32 0, %v115
    %v117 = vrot.slane %v112, %v116
    %vm119 = vcmask 64512
    %v121 = vsel %vm119, %v94, 0
    %123 = vmatprep.subr.mxu0 0.0
    %124 = vmatpush1.msra.mxu0 %v95
    %125 = vmatprep.subr.mxu0 0.0
    %126 = vmatpush1.msra.mxu0 %v96
    %127 = vmatprep.subr.mxu0 0.0
    %128 = vmatpush1.msra.mxu0 %v97
    %129 = vmatprep.subr.mxu0 0.0
    %130 = vmatpush1.msra.mxu0 %v98
    %131 = vmatprep.subr.mxu0 0.0
    %132 = vmatpush1.msra.mxu0 %v99
    %133 = vmatprep.subr.mxu0 0.0
    %134 = vmatpush1.msra.mxu0 %v100
    %135 = vmatprep.subr.mxu0 0.0
    %136 = vmatpush1.msra.mxu0 %v101
    %137 = vmatprep.subr.mxu0 0.0
    %138 = vmatpush1.msra.mxu0 %v102
    %139 = vmatprep.subr.mxu0 0.0
    %140 = vmatpush1.msra.mxu0 %v103
    %141 = vmatprep.subr.mxu0 0.0
    %142 = vmatpush1.msra.mxu0 %v104
    %143 = vmatprep.subr.mxu0 0.0
    %144 = vmatpush1.msra.mxu0 %v105
    %145 = vmatprep.subr.mxu0 0.0
    %146 = vmatpush1.msra.mxu0 %v106
    %147 = vmatprep.subr.mxu0 0.0
    %148 = vmatpush1.msra.mxu0 %v107
    %149 = vmatprep.subr.mxu0 0.0
    %150 = vmatpush1.msra.mxu0 %v108
    %151 = vmatprep.subr.mxu0 0.0
    %152 = vmatpush1.msra.mxu0 %v109
    %153 = vmatprep.subr.mxu0 0.0
    %154 = vmatpush1.msra.mxu0 %v110
    %155 = vmatprep.subr.mxu0 0.0
    %156 = vmatpush1.msra.mxu0 %v111
    %157 = vmatprep.subr.mxu0 0.0
    %158 = vmatpush1.msra.mxu0 0.0
    %159 = vmatprep.subr.mxu0 0.0
    %160 = vmatpush1.msra.mxu0 0.0
    %161 = vmatprep.subr.mxu0 0.0
    %162 = vmatpush1.msra.mxu0 0.0
    %163 = vmatprep.subr.mxu0 0.0
    %164 = vmatpush1.msra.mxu0 0.0
    %165 = vmatprep.subr.mxu0 0.0
    %166 = vmatpush1.msra.mxu0 0.0
    %167 = vmatprep.subr.mxu0 0.0
    %168 = vmatpush1.msra.mxu0 0.0
    %169 = vmatprep.subr.mxu0 0.0
    %170 = vmatpush1.msra.mxu0 0.0
    %171 = vmatprep.subr.mxu0 0.0
    %172 = vmatpush1.msra.mxu0 0.0
    %173 = vmatprep.subr.mxu0 0.0
    %174 = vmatpush1.msra.mxu0 0.0
    %175 = vmatprep.subr.mxu0 0.0
    %176 = vmatpush1.msra.mxu0 0.0
    %177 = vmatprep.subr.mxu0 0.0
    %178 = vmatpush1.msra.mxu0 0.0
    %179 = vmatprep.subr.mxu0 0.0
    %180 = vmatpush1.msra.mxu0 0.0
    %181 = vmatprep.subr.mxu0 0.0
    %182 = vmatpush1.msra.mxu0 0.0
    %183 = vmatprep.subr.mxu0 0.0
    %184 = vmatpush1.msra.mxu0 0.0
    %185 = vmatprep.subr.mxu0 0.0
    %186 = vmatpush1.msra.mxu0 0.0
    %187 = vmatprep.mubr.f32.mxu0 %v121
    %188 = vmatmul.mubr.f32.gmra.mrb[0].mxu0 %v93
    %v189 = vpop.f32.mrb[0].mxu0
    %v190 = vadd.f32 %v117, %v189
    %v191 = vpop.f32.mrb[0].mxu0
    %192 = vdwg.mxu0
    %v193 = vmax.f32 %v190, 0.0
    %v194 = vld [vmem:[#allocation4] sm:$0xff]
    %v195 = vld [vmem:[#allocation4 + $0x8] sm:$0xff]
    %v196 = vld [vmem:[#allocation4 + $0x10] sm:$0xff]
    %v197 = vld [vmem:[#allocation4 + $0x18] sm:$0xff]
    %v198 = vld [vmem:[#allocation4 + $0x20] sm:$0xff]
    %v199 = vld [vmem:[#allocation4 + $0x28] sm:$0xff]
    %v200 = vld [vmem:[#allocation4 + $0x30] sm:$0xff]
    %v201 = vld [vmem:[#allocation4 + $0x38] sm:$0xff]
    %v202 = vld [vmem:[#allocation4 + $0x40] sm:$0xff]
    %v203 = vld [vmem:[#allocation4 + $0x48] sm:$0xff]
    %v204 = vld [vmem:[#allocation4 + $0x50] sm:$0xff]
    %v205 = vld [vmem:[#allocation4 + $0x58] sm:$0xff]
    %v206 = vld [vmem:[#allocation4 + $0x60] sm:$0xff]
    %v207 = vld [vmem:[#allocation4 + $0x68] sm:$0xff]
    %v208 = vld [vmem:[#allocation4 + $0x70] sm:$0xff]
    %v209 = vld [vmem:[#allocation4 + $0x78] sm:$0xff]
    %v210 = vld [vmem:[%s5] sm:$0x1]
    %v212 = vlaneseq
    %v213 = vshrl.u32 %v212, 7
    %v214 = vsub.s32 0, %v213
    %v215 = vrot.slane %v210, %v214
    %217 = vmatprep.subr.mxu0 0.0
    %218 = vmatpush1.msra.mxu0 %v194
    %219 = vmatprep.subr.mxu0 0.0
    %220 = vmatpush1.msra.mxu0 %v195
    %221 = vmatprep.subr.mxu0 0.0
    %222 = vmatpush1.msra.mxu0 %v196
    %223 = vmatprep.subr.mxu0 0.0
    %224 = vmatpush1.msra.mxu0 %v197
    %225 = vmatprep.subr.mxu0 0.0
    %226 = vmatpush1.msra.mxu0 %v198
    %227 = vmatprep.subr.mxu0 0.0
    %228 = vmatpush1.msra.mxu0 %v199
    %229 = vmatprep.subr.mxu0 0.0
    %230 = vmatpush1.msra.mxu0 %v200
    %231 = vmatprep.subr.mxu0 0.0
    %232 = vmatpush1.msra.mxu0 %v201
    %233 = vmatprep.subr.mxu0 0.0
    %234 = vmatpush1.msra.mxu0 %v202
    %235 = vmatprep.subr.mxu0 0.0
    %236 = vmatpush1.msra.mxu0 %v203
    %237 = vmatprep.subr.mxu0 0.0
    %238 = vmatpush1.msra.mxu0 %v204
    %239 = vmatprep.subr.mxu0 0.0
    %240 = vmatpush1.msra.mxu0 %v205
    %241 = vmatprep.subr.mxu0 0.0
    %242 = vmatpush1.msra.mxu0 %v206
    %243 = vmatprep.subr.mxu0 0.0
    %244 = vmatpush1.msra.mxu0 %v207
    %245 = vmatprep.subr.mxu0 0.0
    %246 = vmatpush1.msra.mxu0 %v208
    %247 = vmatprep.subr.mxu0 0.0
    %248 = vmatpush1.msra.mxu0 %v209
    %249 = vmatprep.subr.mxu0 0.0
    %250 = vmatpush1.msra.mxu0 0.0
    %251 = vmatprep.subr.mxu0 0.0
    %252 = vmatpush1.msra.mxu0 0.0
    %253 = vmatprep.subr.mxu0 0.0
    %254 = vmatpush1.msra.mxu0 0.0
    %255 = vmatprep.subr.mxu0 0.0
    %256 = vmatpush1.msra.mxu0 0.0
    %257 = vmatprep.subr.mxu0 0.0
    %258 = vmatpush1.msra.mxu0 0.0
    %259 = vmatprep.subr.mxu0 0.0
    %260 = vmatpush1.msra.mxu0 0.0
    %261 = vmatprep.subr.mxu0 0.0
    %262 = vmatpush1.msra.mxu0 0.0
    %263 = vmatprep.subr.mxu0 0.0
    %264 = vmatpush1.msra.mxu0 0.0
    %265 = vmatprep.subr.mxu0 0.0
    %266 = vmatpush1.msra.mxu0 0.0
    %267 = vmatprep.subr.mxu0 0.0
    %268 = vmatpush1.msra.mxu0 0.0
    %269 = vmatprep.subr.mxu0 0.0
    %270 = vmatpush1.msra.mxu0 0.0
    %271 = vmatprep.subr.mxu0 0.0
    %272 = vmatpush1.msra.mxu0 0.0
    %273 = vmatprep.subr.mxu0 0.0
    %274 = vmatpush1.msra.mxu0 0.0
    %275 = vmatprep.subr.mxu0 0.0
    %276 = vmatpush1.msra.mxu0 0.0
    %277 = vmatprep.subr.mxu0 0.0
    %278 = vmatpush1.msra.mxu0 0.0
    %279 = vmatprep.subr.mxu0 0.0
    %280 = vmatpush1.msra.mxu0 0.0
    %281 = vmatprep.mubr.f32.mxu0 0.0
    %282 = vmatmul.mubr.f32.gmra.mrb[0].mxu0 %v193
    %v283 = vpop.f32.mrb[0].mxu0
    %v284 = vadd.f32 %v215, %v283
    %v285 = vpop.f32.mrb[0].mxu0
    %286 = vdwg.mxu0
    %v287 = vmax.f32 %v284, 0.0
    %v288 = vld [vmem:[#allocation6] sm:$0xff]
    %v289 = vld [vmem:[#allocation6 + $0x8] sm:$0xff]
    %v290 = vld [vmem:[#allocation6 + $0x10] sm:$0xff]
    %v291 = vld [vmem:[#allocation6 + $0x18] sm:$0xff]
    %v292 = vld [vmem:[#allocation6 + $0x20] sm:$0xff]
    %v293 = vld [vmem:[#allocation6 + $0x28] sm:$0xff]
    %v294 = vld [vmem:[#allocation6 + $0x30] sm:$0xff]
    %v295 = vld [vmem:[#allocation6 + $0x38] sm:$0xff]
    %v296 = vld [vmem:[#allocation6 + $0x40] sm:$0xff]
    %v297 = vld [vmem:[#allocation6 + $0x48] sm:$0xff]
    %v298 = vld [vmem:[#allocation6 + $0x50] sm:$0xff]
    %v299 = vld [vmem:[#allocation6 + $0x58] sm:$0xff]
    %v300 = vld [vmem:[#allocation6 + $0x60] sm:$0xff]
    %v301 = vld [vmem:[#allocation6 + $0x68] sm:$0xff]
    %v302 = vld [vmem:[#allocation6 + $0x70] sm:$0xff]
    %v303 = vld [vmem:[#allocation6 + $0x78] sm:$0xff]
    %v304 = vld [vmem:[%s7] sm:$0x1]
    %v306 = vlaneseq
    %v307 = vshrl.u32 %v306, 7
    %v308 = vsub.s32 0, %v307
    %v309 = vrot.slane %v304, %v308
    %311 = vmatprep.subr.mxu0 0.0
    %312 = vmatpush1.msra.mxu0 %v288
    %313 = vmatprep.subr.mxu0 0.0
    %314 = vmatpush1.msra.mxu0 %v289
    %315 = vmatprep.subr.mxu0 0.0
    %316 = vmatpush1.msra.mxu0 %v290
    %317 = vmatprep.subr.mxu0 0.0
    %318 = vmatpush1.msra.mxu0 %v291
    %319 = vmatprep.subr.mxu0 0.0
    %320 = vmatpush1.msra.mxu0 %v292
    %321 = vmatprep.subr.mxu0 0.0
    %322 = vmatpush1.msra.mxu0 %v293
    %323 = vmatprep.subr.mxu0 0.0
    %324 = vmatpush1.msra.mxu0 %v294
    %325 = vmatprep.subr.mxu0 0.0
    %326 = vmatpush1.msra.mxu0 %v295
    %327 = vmatprep.subr.mxu0 0.0
    %328 = vmatpush1.msra.mxu0 %v296
    %329 = vmatprep.subr.mxu0 0.0
    %330 = vmatpush1.msra.mxu0 %v297
    %331 = vmatprep.subr.mxu0 0.0
    %332 = vmatpush1.msra.mxu0 %v298
    %333 = vmatprep.subr.mxu0 0.0
    %334 = vmatpush1.msra.mxu0 %v299
    %335 = vmatprep.subr.mxu0 0.0
    %336 = vmatpush1.msra.mxu0 %v300
    %337 = vmatprep.subr.mxu0 0.0
    %338 = vmatpush1.msra.mxu0 %v301
    %339 = vmatprep.subr.mxu0 0.0
    %340 = vmatpush1.msra.mxu0 %v302
    %341 = vmatprep.subr.mxu0 0.0
    %342 = vmatpush1.msra.mxu0 %v303
    %343 = vmatprep.subr.mxu0 0.0
    %344 = vmatpush1.msra.mxu0 0.0
    %345 = vmatprep.subr.mxu0 0.0
    %346 = vmatpush1.msra.mxu0 0.0
    %347 = vmatprep.subr.mxu0 0.0
    %348 = vmatpush1.msra.mxu0 0.0
    %349 = vmatprep.subr.mxu0 0.0
    %350 = vmatpush1.msra.mxu0 0.0
    %351 = vmatprep.subr.mxu0 0.0
    %352 = vmatpush1.msra.mxu0 0.0
    %353 = vmatprep.subr.mxu0 0.0
    %354 = vmatpush1.msra.mxu0 0.0
    %355 = vmatprep.subr.mxu0 0.0
    %356 = vmatpush1.msra.mxu0 0.0
    %357 = vmatprep.subr.mxu0 0.0
    %358 = vmatpush1.msra.mxu0 0.0
    %359 = vmatprep.subr.mxu0 0.0
    %360 = vmatpush1.msra.mxu0 0.0
    %361 = vmatprep.subr.mxu0 0.0
    %362 = vmatpush1.msra.mxu0 0.0
    %363 = vmatprep.subr.mxu0 0.0
    %364 = vmatpush1.msra.mxu0 0.0
    %365 = vmatprep.subr.mxu0 0.0
    %366 = vmatpush1.msra.mxu0 0.0
    %367 = vmatprep.subr.mxu0 0.0
    %368 = vmatpush1.msra.mxu0 0.0
    %369 = vmatprep.subr.mxu0 0.0
    %370 = vmatpush1.msra.mxu0 0.0
    %371 = vmatprep.subr.mxu0 0.0
    %372 = vmatpush1.msra.mxu0 0.0
    %373 = vmatprep.subr.mxu0 0.0
    %374 = vmatpush1.msra.mxu0 0.0
    %375 = vmatprep.mubr.f32.mxu0 0.0
    %376 = vmatmul.mubr.f32.gmra.mrb[0].mxu0 %v287
    %v377 = vpop.f32.mrb[0].mxu0
    %v378 = vadd.f32 %v309, %v377
    %v379 = vpop.f32.mrb[0].mxu0
    %380 = vdwg.mxu0
    %381 = vst.msk [vmem:[%s8] sm:$0xff] %vm119, %v378
    // Predicated region
    $region46: #{model_forward.1} parent=1 // pred_check
      _
    $region47: #{model_forward.1} parent=1 // pred_check_branch
      %383 = sbr.rel (0) target = $region49
    $region48: #{model_forward.1} parent=1 // pred_region
      _
    $region49: #{model_forward.1} parent=1 // pred_fallthru
      _
    // Predicated region
    $region50: #{model_forward.1} parent=1 // pred_check
      _
    $region51: #{model_forward.1} parent=1 // pred_check_branch
      %385 = sbr.rel (0) target = $region53
    $region52: #{model_forward.1} parent=1 // pred_region
      _
    $region53: #{model_forward.1} parent=1 // pred_fallthru
      _
    %386 = vsyncpa [#allocation3], 1
    %387 = vsyncpa [#allocation5], 1

</llo_original>
